<compile_context>
chip_gen: v5e
topology: v5e:2x2
jax: 0.10.0
libtpu: 0.0.40
codegen_flags: <defaults>
</compile_context>

<pallas_src>
import functools

import jax
import jax.numpy as jnp
import numpy as np
from jax import lax
from jax.experimental import pallas as pl
from jax.experimental.pallas import tpu as pltpu

EPS = 1e-5
VMEM_LIMIT = 48 * 1024 * 1024   # safe on v7x (64 MiB physical) and below
TILE_BUDGET = 16 * 1024 * 1024  # VMEM budget for double-buffered row tiles


# ---------------------------------------------------------------------------
# Pallas kernels
# ---------------------------------------------------------------------------
def _conv_stats_kernel(n_branches, *refs):
    """Pass 1: per-tile conv matmul(s) + per-channel sum / sumsq accumulation.

    refs = p_0..p_{n-1}, w_0..w_{n-1}, y_0..y_{n-1}, stats
    stats rows (2j, 2j+1) hold sum / sum-of-squares of branch j, accumulated
    across the (arbitrary) row-tile grid axis in a resident output block.
    """
    p_refs = refs[:n_branches]
    w_refs = refs[n_branches:2 * n_branches]
    y_refs = refs[2 * n_branches:3 * n_branches]
    stats_ref = refs[3 * n_branches]

    @pl.when(pl.program_id(0) == 0)
    def _():
        stats_ref[...] = jnp.zeros_like(stats_ref)

    for j in range(n_branches):
        # bf16 operands, f32 accumulation on the MXU.
        y = jnp.dot(p_refs[j][...], w_refs[j][...],
                    preferred_element_type=jnp.float32)
        y_refs[j][...] = y
        stats_ref[2 * j:2 * j + 1, :] += jnp.sum(y, axis=0, keepdims=True)
        stats_ref[2 * j + 1:2 * j + 2, :] += jnp.sum(y * y, axis=0,
                                                     keepdims=True)


def _scale_shift(stats_ref, gb_ref, row, inv_m):
    """Fold BN into per-channel scale/shift (single fused mul-add later)."""
    mean = stats_ref[row:row + 1, :] * inv_m
    var = jnp.maximum(stats_ref[row + 1:row + 2, :] * inv_m - mean * mean, 0.0)
    scale = gb_ref[row:row + 1, :] * lax.rsqrt(var + EPS)
    shift = gb_ref[row + 1:row + 2, :] - mean * scale
    return scale, shift


def _bn_relu_kernel(m_true, y_ref, stats_ref, gb_ref, o_ref):
    """Pass 2 (conv1): out = relu(y*scale + shift)."""
    scale, shift = _scale_shift(stats_ref, gb_ref, 0, 1.0 / m_true)
    o_ref[...] = jnp.maximum(y_ref[...] * scale + shift, 0.0).astype(o_ref.dtype)


def _bn_add_relu_kernel(m_true, has_shortcut, y2_ref, res_ref, stats_ref,
                        gb_ref, o_ref):
    """Pass 2 (conv2): out = relu(bn2(y2) + shortcut)."""
    inv_m = 1.0 / m_true
    sc2, sh2 = _scale_shift(stats_ref, gb_ref, 0, inv_m)
    out = y2_ref[...] * sc2 + sh2
    if has_shortcut:
        scs, shs = _scale_shift(stats_ref, gb_ref, 2, inv_m)
        out = out + (res_ref[...] * scs + shs)
    else:
        out = out + res_ref[...]
    o_ref[...] = jnp.maximum(out, 0.0).astype(o_ref.dtype)


# ---------------------------------------------------------------------------
# pallas_call wrappers (tiling / specs only)
# ---------------------------------------------------------------------------
def _round_up(v, m):
    return (v + m - 1) // m * m


def _row_tile(m, bytes_per_row):
    """Largest multiple-of-8 row tile (<=1024) whose double-buffered tiles fit."""
    t = min(1024, _round_up(m, 8))
    while t > 8 and 2 * t * bytes_per_row > TILE_BUDGET:
        t //= 2
    t -= t % 8
    return max(8, t)


def _pad2d(a, rows, cols):
    return jnp.pad(a, ((0, rows - a.shape[0]), (0, cols - a.shape[1])))


def _pack_rows(vecs, cpad):
    return jnp.stack(
        [jnp.pad(v.astype(jnp.float32), (0, cpad - v.shape[0])) for v in vecs],
        axis=0)


def _conv_stats_call(patches, weights, tm, cpad):
    """Run pass-1 kernel over a row-tiled grid; returns (y per branch, stats)."""
    nb = len(patches)
    m_pad = patches[0].shape[0]
    grid = (m_pad // tm,)
    in_specs = ([pl.BlockSpec((tm, p.shape[1]), lambda i: (i, 0)) for p in patches]
                + [pl.BlockSpec(wt.shape, lambda i: (0, 0)) for wt in weights])
    out_shape = ([jax.ShapeDtypeStruct((m_pad, cpad), jnp.float32)
                  for _ in range(nb)]
                 + [jax.ShapeDtypeStruct((2 * nb, cpad), jnp.float32)])
    out_specs = ([pl.BlockSpec((tm, cpad), lambda i: (i, 0)) for _ in range(nb)]
                 + [pl.BlockSpec((2 * nb, cpad), lambda i: (0, 0))])
    outs = pl.pallas_call(
        functools.partial(_conv_stats_kernel, nb),
        grid=grid,
        in_specs=in_specs,
        out_specs=out_specs,
        out_shape=out_shape,
        compiler_params=pltpu.CompilerParams(
            dimension_semantics=("arbitrary",),   # stats is a grid reduction
            vmem_limit_bytes=VMEM_LIMIT),
    )(*patches, *weights)
    return tuple(outs[:nb]), outs[nb]


def _epilogue_call(kernel, tiled, small, tm, cpad, out_dtype):
    """Run a pass-2 (normalize/affine/relu) kernel over a row-tiled grid."""
    m_pad = tiled[0].shape[0]
    grid = (m_pad // tm,)
    in_specs = ([pl.BlockSpec((tm, cpad), lambda i: (i, 0)) for _ in tiled]
                + [pl.BlockSpec(a.shape, lambda i: (0, 0)) for a in small])
    return pl.pallas_call(
        kernel,
        grid=grid,
        in_specs=in_specs,
        out_specs=pl.BlockSpec((tm, cpad), lambda i: (i, 0)),
        out_shape=jax.ShapeDtypeStruct((m_pad, cpad), out_dtype),
        compiler_params=pltpu.CompilerParams(
            dimension_semantics=("parallel",),    # pure elementwise map
            vmem_limit_bytes=VMEM_LIMIT),
    )(*tiled, *small)


def _im2col(x_nhwc, stride):
    """3x3, padding=1 patches. Returns (N*Ho*Wo, 9*C) and (N, Ho, Wo)."""
    n, h, w, c = x_nhwc.shape
    ho = (h + 2 - 3) // stride + 1
    wo = (w + 2 - 3) // stride + 1
    xp = jnp.pad(x_nhwc, ((0, 0), (1, 1), (1, 1), (0, 0)))
    cols = []
    for ky in range(3):
        for kx in range(3):
            cols.append(xp[:, ky:ky + stride * (ho - 1) + 1:stride,
                            kx:kx + stride * (wo - 1) + 1:stride, :])
    patches = jnp.stack(cols, axis=3)            # (N, Ho, Wo, 9, C)
    return patches.reshape(n * ho * wo, 9 * c), (n, ho, wo)


# ---------------------------------------------------------------------------
# BasicBlock forward (NCHW in / NCHW out)
# ---------------------------------------------------------------------------
def basic_block_forward(x_nchw, params, stride):
    x = jnp.transpose(x_nchw, (0, 2, 3, 1)).astype(jnp.float32)    # NHWC f32
    n, h, w, cin = x.shape
    planes = params["w1"].shape[-1]
    cpad = _round_up(planes, 128)                # lane-dense output channels
    x_bf = x.astype(jnp.bfloat16)                # bf16 feeds the MXU
    has_shortcut = (stride != 1) or (cin != planes)

    # ---- conv1 (3x3, stride) + bn1 + relu ----
    p1, (_, ho, wo) = _im2col(x_bf, stride)      # (M, 9*cin) bf16
    m = n * ho * wo

    # One row tile for all four calls, sized against the heaviest call's
    # per-row VMEM footprint (double-buffered row tiles only).
    k1, k2 = 9 * cin, 9 * planes
    bytes_per_row = max(
        k1 * 2 + cpad * 4,                                         # conv1 pass1
        cpad * 4 + cpad * 2,                                       # bn1 epilogue
        k2 * 2 + cpad * 4 + (cin * 2 + cpad * 4 if has_shortcut else 0),
        3 * cpad * 4,                                              # bn2 epilogue
    )
    tm = _row_tile(m, bytes_per_row)
    m_pad = _round_up(m, tm)                     # zero rows don't affect stats

    p1 = _pad2d(p1, m_pad, p1.shape[1])
    w1 = _pad2d(params["w1"].reshape(9 * cin, planes).astype(jnp.bfloat16),
                9 * cin, cpad)
    gb1 = _pack_rows([params["g1"], params["b1"]], cpad)

    (y1,), stats1 = _conv_stats_call([p1], [w1], tm, cpad)
    out1 = _epilogue_call(functools.partial(_bn_relu_kernel, m),
                          [y1], [stats1, gb1], tm, cpad, jnp.bfloat16)
    out1_nhwc = out1[:m, :planes].reshape(n, ho, wo, planes)       # bf16

    # ---- conv2 (3x3, stride 1) + bn2 + shortcut + relu ----
    p2, _ = _im2col(out1_nhwc, 1)                # (M, 9*planes) bf16
    p2 = _pad2d(p2, m_pad, p2.shape[1])
    w2 = _pad2d(params["w2"].reshape(9 * planes, planes).astype(jnp.bfloat16),
                9 * planes, cpad)

    if has_shortcut:
        # TODO(synk): express the strided subsample via a BlockSpec index_map
        # instead of materializing xs in HBM.
        xs = _pad2d(x_bf[:, ::stride, ::stride, :].reshape(m, cin), m_pad, cin)
        ws = _pad2d(params["ws"].reshape(cin, planes).astype(jnp.bfloat16),
                    cin, cpad)
        gb2 = _pack_rows([params["g2"], params["b2"],
                          params["gs"], params["bs"]], cpad)
        (y2, res), stats2 = _conv_stats_call([p2, xs], [w2, ws], tm, cpad)
    else:
        gb2 = _pack_rows([params["g2"], params["b2"]], cpad)
        (y2,), stats2 = _conv_stats_call([p2], [w2], tm, cpad)
        res = _pad2d(x.reshape(m, cin), m_pad, cpad)               # identity

    out = _epilogue_call(
        functools.partial(_bn_add_relu_kernel, m, has_shortcut),
        [y2, res], [stats2, gb2], tm, cpad, jnp.float32)

    out = out[:m, :planes].reshape(n, ho, wo, planes)
    return jnp.transpose(out, (0, 3, 1, 2))                        # NCHW


# ---------------------------------------------------------------------------
# Pure-JAX reference (matches the kernel's bf16-input / f32-accumulate convs)
# ---------------------------------------------------------------------------
def _conv_ref(x, w, stride, padding):
    dn = lax.conv_dimension_numbers(x.shape, w.shape, ("NHWC", "HWIO", "NHWC"))
    return lax.conv_general_dilated(
        x.astype(jnp.bfloat16), w.astype(jnp.bfloat16), (stride, stride),
        padding, dimension_numbers=dn, preferred_element_type=jnp.float32)


def _bn_train_ref(y, g, b):
    mu = jnp.mean(y, axis=(0, 1, 2), keepdims=True)
    var = jnp.mean(jnp.square(y - mu), axis=(0, 1, 2), keepdims=True)
    return (y - mu) * lax.rsqrt(var + EPS) * g + b


def reference_forward(x_nchw, params, stride):
    x = jnp.transpose(x_nchw, (0, 2, 3, 1)).astype(jnp.float32)
    o1 = jnp.maximum(
        _bn_train_ref(_conv_ref(x, params["w1"], stride, ((1, 1), (1, 1))),
                      params["g1"], params["b1"]), 0.0)
    main = _bn_train_ref(_conv_ref(o1, params["w2"], 1, ((1, 1), (1, 1))),
                         params["g2"], params["b2"])
    cin, planes = params["w1"].shape[2], params["w1"].shape[3]
    if stride != 1 or cin != planes:
        short = _bn_train_ref(
            _conv_ref(x, params["ws"].reshape(1, 1, cin, planes), stride,
                      ((0, 0), (0, 0))),
            params["gs"], params["bs"])
    else:
        short = x
    out = jnp.maximum(main + short, 0.0)
    return jnp.transpose(out, (0, 3, 1, 2))


# ---------------------------------------------------------------------------
# Deterministic parameter init (shapes follow BasicBlock.__init__)
# ---------------------------------------------------------------------------
def init_params(key, in_planes, planes, stride):
    ks = jax.random.split(key, 9)
    p = {
        "w1": 0.1 * jax.random.normal(ks[0], (3, 3, in_planes, planes), jnp.float32),
        "g1": 1.0 + 0.1 * jax.random.normal(ks[1], (planes,), jnp.float32),
        "b1": 0.1 * jax.random.normal(ks[2], (planes,), jnp.float32),
        "w2": 0.1 * jax.random.normal(ks[3], (3, 3, planes, planes), jnp.float32),
        "g2": 1.0 + 0.1 * jax.random.normal(ks[4], (planes,), jnp.float32),
        "b2": 0.1 * jax.random.normal(ks[5], (planes,), jnp.float32),
    }
    if stride != 1 or in_planes != planes:
        p["ws"] = 0.1 * jax.random.normal(ks[6], (1, 1, in_planes, planes), jnp.float32)
        p["gs"] = 1.0 + 0.1 * jax.random.normal(ks[7], (planes,), jnp.float32)
        p["bs"] = 0.1 * jax.random.normal(ks[8], (planes,), jnp.float32)
    return p


def _run_case(key, n, c, h, w, planes, stride):
    kx, kp = jax.random.split(key)
    x = jax.random.normal(kx, (n, c, h, w), jnp.float32)
    params = init_params(kp, c, planes, stride)
    out = jax.block_until_ready(basic_block_forward(x, params, stride))
    assert out.shape == (n, planes, h // stride, w // stride), out.shape
    ref = jax.block_until_ready(reference_forward(x, params, stride))
    np.testing.assert_allclose(np.asarray(out), np.asarray(ref),
                               atol=1e-2, rtol=1e-2)


if __name__ == "__main__":
    key = jax.random.PRNGKey(0)
    k1, k2 = jax.random.split(key)

    # conv shortcut path (stride 2, channel change)
    _run_case(k1, 2, 4, 16, 16, 8, 2)
    # identity shortcut path (stride 1, same channels)
    _run_case(k2, 2, 4, 16, 16, 4, 1)

    print("KERNEL_OK")
</pallas_src>

<mosaic_0001>
module attributes {stable_mosaic.version = 11 : i64} {
  func.func @_conv_stats_kernel(%arg0: i32, %arg1: memref<128x36xbf16, #tpu.memory_space<vmem>>, %arg2: memref<36x128xbf16, #tpu.memory_space<vmem>>, %arg3: memref<128x128xf32, #tpu.memory_space<vmem>>, %arg4: memref<2x128xf32, #tpu.memory_space<vmem>>) attributes {dimension_semantics = [#tpu.dimension_semantics<arbitrary>], iteration_bounds = array<i64: 1>, scalar_prefetch = 0 : i64, scratch_operands = 0 : i64, tpu.core_type = #tpu.core_type<tc>, window_params = [{transform_indices = @transform_0, window_bounds = array<i64: 128, 36>}, {pipeline_mode = #tpu.pipeline_mode<synchronous>, transform_indices = @transform_1, window_bounds = array<i64: 36, 128>}, {transform_indices = @transform_2, window_bounds = array<i64: 128, 128>}, {pipeline_mode = #tpu.pipeline_mode<synchronous>, transform_indices = @transform_3, window_bounds = array<i64: 2, 128>}]} {
    %c0_i32 = arith.constant 0 : i32
    %0 = arith.cmpi eq, %arg0, %c0_i32 : i32
    %1 = arith.extui %0 : i1 to i32
    %c0_i32_0 = arith.constant 0 : i32
    %2 = arith.cmpi ne, %1, %c0_i32_0 : i32
    scf.if %2 {
      %cst_15 = arith.constant 0.000000e+00 : f32
      %18 = vector.broadcast %cst_15 : f32 to vector<2x128xf32>
      %c0_16 = arith.constant 0 : index
      %c0_17 = arith.constant 0 : index
      %19 = vector.load %arg4[%c0_16, %c0_17] : memref<2x128xf32, #tpu.memory_space<vmem>>, vector<2x128xf32>
      tpu.vector_store %arg4[%c0_16, %c0_17], %18 {strides = array<i32>} : memref<2x128xf32, #tpu.memory_space<vmem>>, vector<2x128xf32>,
    } else {
    }
    %c0 = arith.constant 0 : index
    %c0_1 = arith.constant 0 : index
    %3 = vector.load %arg1[%c0, %c0_1] : memref<128x36xbf16, #tpu.memory_space<vmem>>, vector<128x36xbf16>
    %c0_2 = arith.constant 0 : index
    %c0_3 = arith.constant 0 : index
    %4 = vector.load %arg2[%c0_2, %c0_3] : memref<36x128xbf16, #tpu.memory_space<vmem>>, vector<36x128xbf16>
    %cst = arith.constant dense<0.000000e+00> : vector<128x128xf32>
    %5 = tpu.matmul %3, %4, %cst {dimension_numbers = #tpu.dot_dimension_numbers<[1], [0], [0], [1], [0, 0, 1, 1], [], []>} : vector<128x36xbf16>, vector<36x128xbf16>, vector<128x128xf32> -> vector<128x128xf32>
    %c0_4 = arith.constant 0 : index
    %c0_5 = arith.constant 0 : index
    %6 = vector.load %arg3[%c0_4, %c0_5] : memref<128x128xf32, #tpu.memory_space<vmem>>, vector<128x128xf32>
    tpu.vector_store %arg3[%c0_4, %c0_5], %5 {strides = array<i32>} : memref<128x128xf32, #tpu.memory_space<vmem>>, vector<128x128xf32>,
    %c0_6 = arith.constant 0 : index
    %c0_7 = arith.constant 0 : index
    %7 = vector.load %arg4[%c0_6, %c0_7] : memref<2x128xf32, #tpu.memory_space<vmem>>, vector<1x128xf32>
    %cst_8 = arith.constant dense<0.000000e+00> : vector<128xf32>
    %8 = vector.multi_reduction <add>, %5, %cst_8 [0] : vector<128x128xf32> to vector<128xf32>
    %9 = vector.shape_cast %8 : vector<128xf32> to vector<1x128xf32>
    %10 = arith.addf %7, %9 : vector<1x128xf32>
    %c0_9 = arith.constant 0 : index
    %c0_10 = arith.constant 0 : index
    %11 = vector.load %arg4[%c0_9, %c0_10] : memref<2x128xf32, #tpu.memory_space<vmem>>, vector<1x128xf32>
    tpu.vector_store %arg4[%c0_9, %c0_10], %10 {strides = array<i32>} : memref<2x128xf32, #tpu.memory_space<vmem>>, vector<1x128xf32>,
    %c1 = arith.constant 1 : index
    %c0_11 = arith.constant 0 : index
    %12 = vector.load %arg4[%c1, %c0_11] : memref<2x128xf32, #tpu.memory_space<vmem>>, vector<1x128xf32>
    %13 = arith.mulf %5, %5 : vector<128x128xf32>
    %cst_12 = arith.constant dense<0.000000e+00> : vector<128xf32>
    %14 = vector.multi_reduction <add>, %13, %cst_12 [0] : vector<128x128xf32> to vector<128xf32>
    %15 = vector.shape_cast %14 : vector<128xf32> to vector<1x128xf32>
    %16 = arith.addf %12, %15 : vector<1x128xf32>
    %c1_13 = arith.constant 1 : index
    %c0_14 = arith.constant 0 : index
    %17 = vector.load %arg4[%c1_13, %c0_14] : memref<2x128xf32, #tpu.memory_space<vmem>>, vector<1x128xf32>
    tpu.vector_store %arg4[%c1_13, %c0_14], %16 {strides = array<i32>} : memref<2x128xf32, #tpu.memory_space<vmem>>, vector<1x128xf32>,
    return
  }
  func.func @transform_0(%arg0: i32) -> (i32, i32) {
    %c0_i32 = arith.constant 0 : i32
    %c0_i32_0 = arith.constant 0 : i32
    return %arg0, %c0_i32 : i32, i32
  }
  func.func @transform_1(%arg0: i32) -> (i32, i32) {
    %c0_i32 = arith.constant 0 : i32
    %c0_i32_0 = arith.constant 0 : i32
    %c0_i32_1 = arith.constant 0 : i32
    return %c0_i32, %c0_i32_0 : i32, i32
  }
  func.func @transform_2(%arg0: i32) -> (i32, i32) {
    %c0_i32 = arith.constant 0 : i32
    %c0_i32_0 = arith.constant 0 : i32
    return %arg0, %c0_i32 : i32, i32
  }
  func.func @transform_3(%arg0: i32) -> (i32, i32) {
    %c0_i32 = arith.constant 0 : i32
    %c0_i32_0 = arith.constant 0 : i32
    %c0_i32_1 = arith.constant 0 : i32
    return %c0_i32, %c0_i32_0 : i32, i32
  }
}

</mosaic_0001>

<llo_original>
// kernel: tpu_custom_call.1
$region0: #{tpu_custom_call.1}
  #allocation0 [shape = 'u32[]', space=smem, size = 0x4, offset = 0x4, fixed_abs, tag = 'smem constant byte address 0x4 - core index']
  #allocation1 [shape = 'u32[72,128]{1,0:T(1,128)}', space=vmem, size = 0x9000, scoped, tag = 'internal scratch']
  %s0 = inlined_call_operand.vmem [shape: bf16[128,36], index: 0, kind: input, shape index: {}]
  %s1 = inlined_call_operand.vmem [shape: bf16[36,128], index: 1, kind: input, shape index: {}]
  %s2 = inlined_call_operand.hbm [shape: f32[128,128], index: 2, kind: output, shape index: {0}]
  %s3 = inlined_call_operand.hbm [shape: f32[2,128], index: 3, kind: output, shape index: {1}]
  %4 = xla_tuple %s2, %s3
  %s5 = sld [smem:[#allocation0]]
  $region30: #{tpu_custom_call.1} parent=0
    _
  %s7 = ssub.s32 1, %s5
  %s8 = scalar_select 0, %s7, %s5
  $region1: #{tpu_custom_call.1} parent=0
    #allocation2 [shape = 'u8[65536]{0}', space=vmem, size = 0x10000, scoped, tag = 'output window, operand 0, single buffered']
    #allocation3 [shape = 's32[1]{0}', space=sflag, size = 0x4, scoped, tag = 'scoped memory for tpu_custom_call.1']
    #allocation4 [shape = 'u8[1024]{0}', space=vmem, size = 0x400, scoped, tag = 'output window, operand 1, single buffered']
    #allocation5 [shape = 's32[1]{0}', space=sflag, size = 0x4, scoped, tag = 'scoped memory for tpu_custom_call.1']
    %9 = vsyncpa [#allocation3], 0
    %10 = vsyncpa [#allocation5], 0
    // Predicated region
    $region2: #{tpu_custom_call.1} parent=1 // pred_check
      _
    $region3: #{tpu_custom_call.1} parent=1 // pred_check_branch
      %12 = sbr.rel (0) target = $region5
    $region4: #{tpu_custom_call.1} parent=1 // pred_region
      _
    $region5: #{tpu_custom_call.1} parent=1 // pred_fallthru
      _
    // Predicated region
    $region6: #{tpu_custom_call.1} parent=1 // pred_check
      _
    $region7: #{tpu_custom_call.1} parent=1 // pred_check_branch
      %14 = sbr.rel (0) target = $region9
    $region8: #{tpu_custom_call.1} parent=1 // pred_region
      _
    $region9: #{tpu_custom_call.1} parent=1 // pred_fallthru
      _
    %p16 = scmp.eq.s32.totalorder 0, 0
    // Predicated region
    $region10: #{tpu_custom_call.1} parent=1 // pred_check
      %p17 = pneg %p16
    $region11: #{tpu_custom_call.1} parent=1 // pred_check_branch
      %19 = sbr.rel (%p17) target = $region13
    $region12: #{tpu_custom_call.1} parent=1 // pred_region
      %20 = vst [vmem:[#allocation4] sm:$0x3] 0.0
    $region13: #{tpu_custom_call.1} parent=1 // pred_fallthru
      _
    %v21 = vld [vmem:[%s0] sm:$0xf]
    %v22 = vld [vmem:[%s0 + $0x4] sm:$0xf]
    %v23 = vld [vmem:[%s0 + $0x8] sm:$0xf]
    %v24 = vld [vmem:[%s0 + $0xc] sm:$0xf]
    %v25 = vld [vmem:[%s0 + $0x10] sm:$0xf]
    %v26 = vld [vmem:[%s0 + $0x14] sm:$0xf]
    %v27 = vld [vmem:[%s0 + $0x18] sm:$0xf]
    %v28 = vld [vmem:[%s0 + $0x1c] sm:$0xf]
    %v29 = vld [vmem:[%s0 + $0x20] sm:$0xf]
    %v30 = vld [vmem:[%s0 + $0x24] sm:$0xf]
    %v31 = vld [vmem:[%s0 + $0x28] sm:$0xf]
    %v32 = vld [vmem:[%s0 + $0x2c] sm:$0xf]
    %v33 = vld [vmem:[%s0 + $0x30] sm:$0xf]
    %v34 = vld [vmem:[%s0 + $0x34] sm:$0xf]
    %v35 = vld [vmem:[%s0 + $0x38] sm:$0xf]
    %v36 = vld [vmem:[%s0 + $0x3c] sm:$0xf]
    %v37 = vld [vmem:[%s1] sm:$0xf]
    %v38 = vld [vmem:[%s1 + $0x4] sm:$0xf]
    %v39 = vld [vmem:[%s1 + $0x8] sm:$0xf]
    %v40 = vld [vmem:[%s1 + $0xc] sm:$0xf]
    %v41 = vld [vmem:[%s1 + $0x10] sm:$0x3]
    %v58 = vunpack.c.l.b16 %v21
    %v59 = vunpack.c.l.b16 %v22
    %v60 = vunpack.c.l.b16 %v23
    %v61 = vunpack.c.l.b16 %v24
    %v62 = vunpack.c.l.b16 %v25
    %v63 = vunpack.c.l.b16 %v26
    %v64 = vunpack.c.l.b16 %v27
    %v65 = vunpack.c.l.b16 %v28
    %v66 = vunpack.c.l.b16 %v29
    %v67 = vunpack.c.l.b16 %v30
    %v68 = vunpack.c.l.b16 %v31
    %v69 = vunpack.c.l.b16 %v32
    %v70 = vunpack.c.l.b16 %v33
    %v71 = vunpack.c.l.b16 %v34
    %v72 = vunpack.c.l.b16 %v35
    %v73 = vunpack.c.l.b16 %v36
    %v74 = vpack.c.b16 %v59, %v58
    %v75 = vpack.c.b16 %v61, %v60
    %v76 = vpack.c.b16 %v63, %v62
    %v77 = vpack.c.b16 %v65, %v64
    %v78 = vpack.c.b16 %v67, %v66
    %v79 = vpack.c.b16 %v69, %v68
    %v80 = vpack.c.b16 %v71, %v70
    %v81 = vpack.c.b16 %v73, %v72
    %v87 = vunpack.c.l.b16 %v37
    %v88 = vunpack.c.l.b16 %v38
    %v89 = vunpack.c.l.b16 %v39
    %v90 = vunpack.c.l.b16 %v40
    %v91 = vunpack.c.l.b16 %v41
    %v92 = vpack.c.b16 %v88, %v87
    %v93 = vpack.c.b16 %v90, %v89
    %v94 = vpack.c.b16 %v91, %v91
    %vm97 = vcmask 293888
    %v99 = vsel %vm97, %v74, 0
    %v102 = vsel %vm97, %v75, 0
    %v105 = vsel %vm97, %v76, 0
    %v108 = vsel %vm97, %v77, 0
    %v111 = vsel %vm97, %v78, 0
    %v114 = vsel %vm97, %v79, 0
    %v117 = vsel %vm97, %v80, 0
    %v120 = vsel %vm97, %v81, 0
    %vm122 = vcmask 1041408
    %v124 = vsel %vm122, %v94, 0
    %126 = vmatpush.bf16.msra.mxu0 0
    %127 = vmatpush.bf16.msra.mxu0 0
    %128 = vmatpush.bf16.msra.mxu0 0
    %129 = vmatpush.bf16.msra.mxu0 0
    %130 = vmatpush.bf16.msra.mxu0 0
    %131 = vmatpush.bf16.msra.mxu0 %v124
    %132 = vmatpush.bf16.msra.mxu0 %v93
    %133 = vmatpush.bf16.msra.mxu0 %v92
    %134 = vmatmul.bf16.gmra.mxu0 %v99
    %v135 = vpop.f32.mrf.mxu0
    %v136 = vadd.f32 0.0, %v135
    %v137 = vpop.f32.mrf.mxu0
    %v138 = vadd.f32 0.0, %v137
    %139 = vmatmul.bf16.gmra.mxu0 %v102
    %v140 = vpop.f32.mrf.mxu0
    %v141 = vadd.f32 0.0, %v140
    %v142 = vpop.f32.mrf.mxu0
    %v143 = vadd.f32 0.0, %v142
    %144 = vmatmul.bf16.gmra.mxu0 %v105
    %v145 = vpop.f32.mrf.mxu0
    %v146 = vadd.f32 0.0, %v145
    %v147 = vpop.f32.mrf.mxu0
    %v148 = vadd.f32 0.0, %v147
    %149 = vmatmul.bf16.gmra.mxu0 %v108
    %v150 = vpop.f32.mrf.mxu0
    %v151 = vadd.f32 0.0, %v150
    %v152 = vpop.f32.mrf.mxu0
    %v153 = vadd.f32 0.0, %v152
    %154 = vmatmul.bf16.gmra.mxu0 %v111
    %v155 = vpop.f32.mrf.mxu0
    %v156 = vadd.f32 0.0, %v155
    %v157 = vpop.f32.mrf.mxu0
    %v158 = vadd.f32 0.0, %v157
    %159 = vmatmul.bf16.gmra.mxu0 %v114
    %v160 = vpop.f32.mrf.mxu0
    %v161 = vadd.f32 0.0, %v160
    %v162 = vpop.f32.mrf.mxu0
    %v163 = vadd.f32 0.0, %v162
    %164 = vmatmul.bf16.gmra.mxu0 %v117
    %v165 = vpop.f32.mrf.mxu0
    %v166 = vadd.f32 0.0, %v165
    %v167 = vpop.f32.mrf.mxu0
    %v168 = vadd.f32 0.0, %v167
    %169 = vmatmul.bf16.gmra.mxu0 %v120
    %v170 = vpop.f32.mrf.mxu0
    %v171 = vadd.f32 0.0, %v170
    %v172 = vpop.f32.mrf.mxu0
    %v173 = vadd.f32 0.0, %v172
    %174 = vdwg.mxu0
    %175 = vst [vmem:[#allocation2] sm:$0xff] %v136
    %176 = vst [vmem:[#allocation2 + $0x8] sm:$0xff] %v138
    %177 = vst [vmem:[#allocation2 + $0x10] sm:$0xff] %v141
    %178 = vst [vmem:[#allocation2 + $0x18] sm:$0xff] %v143
    %179 = vst [vmem:[#allocation2 + $0x20] sm:$0xff] %v146
    %180 = vst [vmem:[#allocation2 + $0x28] sm:$0xff] %v148
    %181 = vst [vmem:[#allocation2 + $0x30] sm:$0xff] %v151
    %182 = vst [vmem:[#allocation2 + $0x38] sm:$0xff] %v153
    %183 = vst [vmem:[#allocation2 + $0x40] sm:$0xff] %v156
    %184 = vst [vmem:[#allocation2 + $0x48] sm:$0xff] %v158
    %185 = vst [vmem:[#allocation2 + $0x50] sm:$0xff] %v161
    %186 = vst [vmem:[#allocation2 + $0x58] sm:$0xff] %v163
    %187 = vst [vmem:[#allocation2 + $0x60] sm:$0xff] %v166
    %188 = vst [vmem:[#allocation2 + $0x68] sm:$0xff] %v168
    %189 = vst [vmem:[#allocation2 + $0x70] sm:$0xff] %v171
    %190 = vst [vmem:[#allocation2 + $0x78] sm:$0xff] %v173
    %v191 = vld [vmem:[#allocation4] sm:$0x1]
    %v192 = vadd.f32 %v136, %v138
    %v193 = vadd.f32 %v192, %v141
    %v194 = vadd.f32 %v193, %v143
    %v195 = vadd.f32 %v194, %v146
    %v196 = vadd.f32 %v195, %v148
    %v197 = vadd.f32 %v196, %v151
    %v198 = vadd.f32 %v197, %v153
    %v199 = vadd.f32 %v198, %v156
    %v200 = vadd.f32 %v199, %v158
    %v201 = vadd.f32 %v200, %v161
    %v202 = vadd.f32 %v201, %v163
    %v203 = vadd.f32 %v202, %v166
    %v204 = vadd.f32 %v203, %v168
    %v205 = vadd.f32 %v204, %v171
    %v206 = vadd.f32 %v205, %v173
    %v207 = vrot.slane %v206, 4
    %v208 = vadd.f32 %v206, %v207
    %v209 = vrot.slane %v208, 2
    %v210 = vadd.f32 %v208, %v209
    %v211 = vrot.slane %v210, 1
    %v212 = vadd.f32 %v210, %v211
    %v213 = vadd.f32 %v191, %v212
    %214 = vst [vmem:[#allocation4] sm:$0x1] %v213
    %v215 = vld [vmem:[#allocation4 + $0x1] sm:$0x1]
    %v216 = vmul.f32 %v136, %v136
    %v217 = vmul.f32 %v138, %v138
    %v218 = vmul.f32 %v141, %v141
    %v219 = vmul.f32 %v143, %v143
    %v220 = vmul.f32 %v146, %v146
    %v221 = vmul.f32 %v148, %v148
    %v222 = vmul.f32 %v151, %v151
    %v223 = vmul.f32 %v153, %v153
    %v224 = vmul.f32 %v156, %v156
    %v225 = vmul.f32 %v158, %v158
    %v226 = vmul.f32 %v161, %v161
    %v227 = vmul.f32 %v163, %v163
    %v228 = vmul.f32 %v166, %v166
    %v229 = vmul.f32 %v168, %v168
    %v230 = vmul.f32 %v171, %v171
    %v231 = vmul.f32 %v173, %v173
    %v232 = vadd.f32 %v216, %v217
    %v233 = vadd.f32 %v232, %v218
    %v234 = vadd.f32 %v233, %v219
    %v235 = vadd.f32 %v234, %v220
    %v236 = vadd.f32 %v235, %v221
    %v237 = vadd.f32 %v236, %v222
    %v238 = vadd.f32 %v237, %v223
    %v239 = vadd.f32 %v238, %v224
    %v240 = vadd.f32 %v239, %v225
    %v241 = vadd.f32 %v240, %v226
    %v242 = vadd.f32 %v241, %v227
    %v243 = vadd.f32 %v242, %v228
    %v244 = vadd.f32 %v243, %v229
    %v245 = vadd.f32 %v244, %v230
    %v246 = vadd.f32 %v245, %v231
    %v247 = vrot.slane %v246, 4
    %v248 = vadd.f32 %v246, %v247
    %v249 = vrot.slane %v248, 2
    %v250 = vadd.f32 %v248, %v249
    %v251 = vrot.slane %v250, 1
    %v252 = vadd.f32 %v250, %v251
    %v253 = vadd.f32 %v215, %v252
    %254 = vst [vmem:[#allocation4 + $0x1] sm:$0x1] %v253
    // Predicated region
    $region14: #{tpu_custom_call.1} parent=1 // pred_check
      _
    $region15: #{tpu_custom_call.1} parent=1 // pred_check_branch
      %256 = sbr.rel (0) target = $region17
    $region16: #{tpu_custom_call.1} parent=1 // pred_region
      %258 = vsyncadd [#allocation3], 0
      %s259 = sshll.u32 [#allocation2], 4
      %s260 = int_to_ptr.vmem [resolvable:$true] %s259
      %s261 = sshll.u32 %s2, 4
      %s262 = int_to_ptr.hbm [resolvable:$true] %s261
      %267 = dma.vmem_to_hbm [thread:$0]  %s260, 2048, %s262, [#allocation3], 128, 128, 8
    $region17: #{tpu_custom_call.1} parent=1 // pred_fallthru
      _
    // Predicated region
    $region18: #{tpu_custom_call.1} parent=1 // pred_check
      _
    $region19: #{tpu_custom_call.1} parent=1 // pred_check_branch
      %269 = sbr.rel (0) target = $region21
    $region20: #{tpu_custom_call.1} parent=1 // pred_region
      %271 = vsyncadd [#allocation5], 0
      %s273 = sshll.u32 [#allocation4], 4
      %s274 = int_to_ptr.vmem [resolvable:$true] %s273
      %s275 = sshll.u32 %s3, 4
      %s276 = int_to_ptr.hbm [resolvable:$true] %s275
      %278 = dma.vmem_to_hbm [thread:$0]  %s274, 32, %s276, [#allocation5]
    $region21: #{tpu_custom_call.1} parent=1 // pred_fallthru
      _
    // Predicated region
    $region22: #{tpu_custom_call.1} parent=1 // pred_check
      _
    $region23: #{tpu_custom_call.1} parent=1 // pred_check_branch
      %280 = sbr.rel (0) target = $region25
    $region24: #{tpu_custom_call.1} parent=1 // pred_region
      %282 = dma.done [#allocation3], 2048
    $region25: #{tpu_custom_call.1} parent=1 // pred_fallthru
      _
    // Predicated region
    $region26: #{tpu_custom_call.1} parent=1 // pred_check
      _
    $region27: #{tpu_custom_call.1} parent=1 // pred_check_branch
      %284 = sbr.rel (0) target = $region29
    $region28: #{tpu_custom_call.1} parent=1 // pred_region
      %286 = dma.done [#allocation5], 32
    $region29: #{tpu_custom_call.1} parent=1 // pred_fallthru
      _
    %287 = vsyncpa [#allocation3], 1
    %288 = vsyncpa [#allocation5], 1

</llo_original>
